<compile_context>
chip_gen: v7x
topology: tpu7x:2x2x1
jax: 0.10.0
libtpu: 0.0.40
codegen_flags: <defaults>
</compile_context>

<pallas_src>
import functools

import jax
import jax.numpy as jnp
from jax.experimental import pallas as pl
from jax.experimental.pallas import tpu as pltpu

LANE = 128


def _lif_kernel(x_ref, o_ref, mem_ref, *, tau, thresh, tb):
    """Runs TB LIF time steps on a (tile_nc, TB, HW/128, 128) slab.

    Per step:  mem_t   = mem_{t-1} * tau + x_t
               spike_t = (mem_t - thresh > 0)         # ZIF forward
               mem_t  <- mem_t - spike_t * thresh     # soft reset
    The membrane potential persists in f32 VMEM scratch across the time
    ("arbitrary") grid axis.
    """
    @pl.when(pl.program_id(1) == 0)
    def _():
        mem_ref[...] = jnp.zeros_like(mem_ref)

    mem = mem_ref[...]
    # Fully-unrolled time loop (TB is small, <= 8 by default); static indices
    # keep every load/store a dense, unmasked (8,128)-tiled access.
    for t in range(tb):
        mem = mem * tau + x_ref[:, t].astype(jnp.float32)
        spike = mem > thresh
        o_ref[:, t] = spike.astype(o_ref.dtype)
        mem = jnp.where(spike, mem - thresh, mem)  # soft reset, no extra mul
    mem_ref[...] = mem


def _tpu_info():
    """(vmem_capacity_bytes, multi_tensorcore_chip) with safe fallbacks."""
    vmem_bytes = 64 << 20   # conservative default (v7x per-TC VMEM)
    multi_tc = False
    try:
        vmem_bytes = int(pltpu.get_tpu_info().vmem_capacity_bytes)
    except Exception:
        pass
    try:
        kind = jax.devices()[0].device_kind.lower()
        multi_tc = "v7" in kind   # v7x: 2 TensorCores per chip (megacore)
    except Exception:
        pass
    return vmem_bytes, multi_tc


def lif_spike(x, *, thresh=0.5, tau=0.5, out_dtype=None,
              target_block_bytes=None, time_block=8):
    """x: (N, C, T, H, W) -> spikes, same shape (ZIF forward, soft reset).

    out_dtype: optional narrower spike dtype (e.g. bf16/int8) to cut write
    bandwidth; defaults to x.dtype to match the PyTorch module.
    """
    N, C, T, H, W = x.shape
    NC, HW = N * C, H * W
    # TODO(synk): pad/mask the spatial dim when H*W is not a multiple of 128.
    assert HW % LANE == 0, "H*W must be a multiple of 128"
    HWR = HW // LANE

    out_dtype = x.dtype if out_dtype is None else jnp.dtype(out_dtype)
    itemsize = jnp.dtype(x.dtype).itemsize
    out_itemsize = jnp.dtype(out_dtype).itemsize

    vmem_cap, multi_tc = _tpu_info()
    if target_block_bytes is None:
        # ~8 MiB blocks on v7x (64 MiB VMEM/TC), ~16 MiB on v5e/v6e (128 MiB).
        target_block_bytes = max(1 << 20, vmem_cap // 8)

    # --- time blocking: big contiguous DMAs + fewer grid steps ---------------
    tb = max(1, min(T, int(time_block), target_block_bytes // (HW * itemsize)))
    row_bytes = tb * HW * itemsize

    # --- NC tiling: biggest tile under the VMEM target ----------------------
    cap = max(1, target_block_bytes // row_bytes)
    if multi_tc and NC >= 2:
        # Keep >=2 parallel grid steps only where there are 2 TensorCores.
        cap = min(cap, pl.cdiv(NC, 2))
    tile_nc = max(1, min(cap, NC))

    grid = (pl.cdiv(NC, tile_nc), pl.cdiv(T, tb))   # partial edge blocks OK

    # --- VMEM budget: 2x double-buffered in + out + f32 mem scratch ---------
    in_block = tile_nc * tb * HW * itemsize
    out_block = tile_nc * tb * HW * out_itemsize
    scratch_bytes = tile_nc * HW * 4
    needed = 2 * in_block + 2 * out_block + scratch_bytes + (4 << 20)
    vmem_limit = min(max(needed, 32 << 20), int(0.78 * vmem_cap))
    vmem_limit = int(max(vmem_limit, needed))       # never below what we need

    xr = x.reshape(NC, T, HWR, LANE)                # contiguous: no data movement

    kernel = functools.partial(
        _lif_kernel, tau=float(tau), thresh=float(thresh), tb=int(tb))

    out = pl.pallas_call(
        kernel,
        out_shape=jax.ShapeDtypeStruct((NC, T, HWR, LANE), out_dtype),
        grid=grid,
        in_specs=[pl.BlockSpec((tile_nc, tb, HWR, LANE),
                               lambda b, t: (b, t, 0, 0))],
        out_specs=pl.BlockSpec((tile_nc, tb, HWR, LANE),
                               lambda b, t: (b, t, 0, 0)),
        scratch_shapes=[pltpu.VMEM((tile_nc, HWR, LANE), jnp.float32)],
        compiler_params=pltpu.CompilerParams(
            dimension_semantics=("parallel", "arbitrary"),
            vmem_limit_bytes=vmem_limit,
        ),
    )(xr)

    return out.reshape(N, C, T, H, W)


def _lif_reference(x, *, thresh=0.5, tau=0.5):
    """Pure-JAX reference mirroring the PyTorch loop."""
    T = x.shape[2]
    mem = jnp.zeros_like(x[:, :, 0])
    outs = []
    for t in range(T):
        mem = mem * tau + x[:, :, t]
        spike = (mem - thresh > 0.0).astype(x.dtype)
        mem = mem - spike * thresh
        outs.append(spike)
    return jnp.stack(outs, axis=2)


if __name__ == "__main__":
    # (N, C, T, H, W) consistent with the module's forward.
    N, C, T, H, W = 2, 4, 8, 16, 16
    key = jax.random.PRNGKey(0)
    x = jax.random.normal(key, (N, C, T, H, W), dtype=jnp.float32)

    out = jax.block_until_ready(lif_spike(x, thresh=0.5, tau=0.5))
    ref = _lif_reference(x, thresh=0.5, tau=0.5)

    assert out.shape == x.shape and out.dtype == x.dtype
    assert bool(jnp.all(out == ref)), "Pallas LIF output mismatch vs reference"
    print("KERNEL_OK")
</pallas_src>

<mosaic_0001>
module attributes {stable_mosaic.version = 11 : i64} {
  func.func @_lif_kernel(%arg0: i32, %arg1: i32, %arg2: memref<8x8x2x128xf32, #tpu.memory_space<vmem>>, %arg3: memref<8x8x2x128xf32, #tpu.memory_space<vmem>>, %arg4: memref<8x2x128xf32, #tpu.memory_space<vmem>>) attributes {dimension_semantics = [#tpu.dimension_semantics<parallel>, #tpu.dimension_semantics<arbitrary>], iteration_bounds = array<i64: 1, 1>, scalar_prefetch = 0 : i64, scratch_operands = 1 : i64, tpu.core_type = #tpu.core_type<tc>, window_params = [{transform_indices = @transform_0, window_bounds = array<i64: 8, 8, 2, 128>}, {transform_indices = @transform_1, window_bounds = array<i64: 8, 8, 2, 128>}]} {
    %c0_i32 = arith.constant 0 : i32
    %0 = arith.cmpi eq, %arg1, %c0_i32 : i32
    %1 = arith.extui %0 : i1 to i32
    %c0_i32_0 = arith.constant 0 : i32
    %2 = arith.cmpi ne, %1, %c0_i32_0 : i32
    scf.if %2 {
      %cst_86 = arith.constant 0.000000e+00 : f32
      %125 = vector.broadcast %cst_86 : f32 to vector<8x2x128xf32>
      %c0_87 = arith.constant 0 : index
      %c0_88 = arith.constant 0 : index
      %c0_89 = arith.constant 0 : index
      %126 = vector.load %arg4[%c0_87, %c0_88, %c0_89] : memref<8x2x128xf32, #tpu.memory_space<vmem>>, vector<8x2x128xf32>
      tpu.vector_store %arg4[%c0_87, %c0_88, %c0_89], %125 {strides = array<i32>} : memref<8x2x128xf32, #tpu.memory_space<vmem>>, vector<8x2x128xf32>,
    } else {
    }
    %c0 = arith.constant 0 : index
    %c0_1 = arith.constant 0 : index
    %c0_2 = arith.constant 0 : index
    %3 = vector.load %arg4[%c0, %c0_1, %c0_2] : memref<8x2x128xf32, #tpu.memory_space<vmem>>, vector<8x2x128xf32>
    %cst = arith.constant 5.000000e-01 : f32
    %4 = vector.broadcast %cst : f32 to vector<8x2x128xf32>
    %5 = arith.mulf %3, %4 : vector<8x2x128xf32>
    %c0_3 = arith.constant 0 : index
    %c0_4 = arith.constant 0 : index
    %c0_5 = arith.constant 0 : index
    %c0_6 = arith.constant 0 : index
    %6 = vector.load %arg2[%c0_3, %c0_4, %c0_5, %c0_6] : memref<8x8x2x128xf32, #tpu.memory_space<vmem>>, vector<8x1x2x128xf32>
    %7 = vector.shape_cast %6 : vector<8x1x2x128xf32> to vector<8x2x128xf32>
    %8 = arith.addf %5, %7 : vector<8x2x128xf32>
    %cst_7 = arith.constant 5.000000e-01 : f32
    %9 = vector.broadcast %cst_7 : f32 to vector<8x2x128xf32>
    %10 = arith.cmpf ogt, %8, %9 : vector<8x2x128xf32>
    %11 = arith.extui %10 : vector<8x2x128xi1> to vector<8x2x128xi32>
    %12 = arith.sitofp %11 : vector<8x2x128xi32> to vector<8x2x128xf32>
    %c0_8 = arith.constant 0 : index
    %c0_9 = arith.constant 0 : index
    %c0_10 = arith.constant 0 : index
    %c0_11 = arith.constant 0 : index
    %13 = vector.load %arg3[%c0_8, %c0_9, %c0_10, %c0_11] : memref<8x8x2x128xf32, #tpu.memory_space<vmem>>, vector<8x1x2x128xf32>
    %14 = vector.shape_cast %13 : vector<8x1x2x128xf32> to vector<8x2x128xf32>
    %15 = vector.shape_cast %12 : vector<8x2x128xf32> to vector<8x1x2x128xf32>
    tpu.vector_store %arg3[%c0_8, %c0_9, %c0_10, %c0_11], %15 {strides = array<i32>} : memref<8x8x2x128xf32, #tpu.memory_space<vmem>>, vector<8x1x2x128xf32>,
    %cst_12 = arith.constant 5.000000e-01 : f32
    %16 = vector.broadcast %cst_12 : f32 to vector<8x2x128xf32>
    %17 = arith.subf %8, %16 : vector<8x2x128xf32>
    %18 = arith.select %10, %17, %8 : vector<8x2x128xi1>, vector<8x2x128xf32>
    %cst_13 = arith.constant 5.000000e-01 : f32
    %19 = vector.broadcast %cst_13 : f32 to vector<8x2x128xf32>
    %20 = arith.mulf %18, %19 : vector<8x2x128xf32>
    %c0_14 = arith.constant 0 : index
    %c1 = arith.constant 1 : index
    %c0_15 = arith.constant 0 : index
    %c0_16 = arith.constant 0 : index
    %21 = vector.load %arg2[%c0_14, %c1, %c0_15, %c0_16] : memref<8x8x2x128xf32, #tpu.memory_space<vmem>>, vector<8x1x2x128xf32>
    %22 = vector.shape_cast %21 : vector<8x1x2x128xf32> to vector<8x2x128xf32>
    %23 = arith.addf %20, %22 : vector<8x2x128xf32>
    %cst_17 = arith.constant 5.000000e-01 : f32
    %24 = vector.broadcast %cst_17 : f32 to vector<8x2x128xf32>
    %25 = arith.cmpf ogt, %23, %24 : vector<8x2x128xf32>
    %26 = arith.extui %25 : vector<8x2x128xi1> to vector<8x2x128xi32>
    %27 = arith.sitofp %26 : vector<8x2x128xi32> to vector<8x2x128xf32>
    %c0_18 = arith.constant 0 : index
    %c1_19 = arith.constant 1 : index
    %c0_20 = arith.constant 0 : index
    %c0_21 = arith.constant 0 : index
    %28 = vector.load %arg3[%c0_18, %c1_19, %c0_20, %c0_21] : memref<8x8x2x128xf32, #tpu.memory_space<vmem>>, vector<8x1x2x128xf32>
    %29 = vector.shape_cast %28 : vector<8x1x2x128xf32> to vector<8x2x128xf32>
    %30 = vector.shape_cast %27 : vector<8x2x128xf32> to vector<8x1x2x128xf32>
    tpu.vector_store %arg3[%c0_18, %c1_19, %c0_20, %c0_21], %30 {strides = array<i32>} : memref<8x8x2x128xf32, #tpu.memory_space<vmem>>, vector<8x1x2x128xf32>,
    %cst_22 = arith.constant 5.000000e-01 : f32
    %31 = vector.broadcast %cst_22 : f32 to vector<8x2x128xf32>
    %32 = arith.subf %23, %31 : vector<8x2x128xf32>
    %33 = arith.select %25, %32, %23 : vector<8x2x128xi1>, vector<8x2x128xf32>
    %cst_23 = arith.constant 5.000000e-01 : f32
    %34 = vector.broadcast %cst_23 : f32 to vector<8x2x128xf32>
    %35 = arith.mulf %33, %34 : vector<8x2x128xf32>
    %c0_24 = arith.constant 0 : index
    %c2 = arith.constant 2 : index
    %c0_25 = arith.constant 0 : index
    %c0_26 = arith.constant 0 : index
    %36 = vector.load %arg2[%c0_24, %c2, %c0_25, %c0_26] : memref<8x8x2x128xf32, #tpu.memory_space<vmem>>, vector<8x1x2x128xf32>
    %37 = vector.shape_cast %36 : vector<8x1x2x128xf32> to vector<8x2x128xf32>
    %38 = arith.addf %35, %37 : vector<8x2x128xf32>
    %cst_27 = arith.constant 5.000000e-01 : f32
    %39 = vector.broadcast %cst_27 : f32 to vector<8x2x128xf32>
    %40 = arith.cmpf ogt, %38, %39 : vector<8x2x128xf32>
    %41 = arith.extui %40 : vector<8x2x128xi1> to vector<8x2x128xi32>
    %42 = arith.sitofp %41 : vector<8x2x128xi32> to vector<8x2x128xf32>
    %c0_28 = arith.constant 0 : index
    %c2_29 = arith.constant 2 : index
    %c0_30 = arith.constant 0 : index
    %c0_31 = arith.constant 0 : index
    %43 = vector.load %arg3[%c0_28, %c2_29, %c0_30, %c0_31] : memref<8x8x2x128xf32, #tpu.memory_space<vmem>>, vector<8x1x2x128xf32>
    %44 = vector.shape_cast %43 : vector<8x1x2x128xf32> to vector<8x2x128xf32>
    %45 = vector.shape_cast %42 : vector<8x2x128xf32> to vector<8x1x2x128xf32>
    tpu.vector_store %arg3[%c0_28, %c2_29, %c0_30, %c0_31], %45 {strides = array<i32>} : memref<8x8x2x128xf32, #tpu.memory_space<vmem>>, vector<8x1x2x128xf32>,
    %cst_32 = arith.constant 5.000000e-01 : f32
    %46 = vector.broadcast %cst_32 : f32 to vector<8x2x128xf32>
    %47 = arith.subf %38, %46 : vector<8x2x128xf32>
    %48 = arith.select %40, %47, %38 : vector<8x2x128xi1>, vector<8x2x128xf32>
    %cst_33 = arith.constant 5.000000e-01 : f32
    %49 = vector.broadcast %cst_33 : f32 to vector<8x2x128xf32>
    %50 = arith.mulf %48, %49 : vector<8x2x128xf32>
    %c0_34 = arith.constant 0 : index
    %c3 = arith.constant 3 : index
    %c0_35 = arith.constant 0 : index
    %c0_36 = arith.constant 0 : index
    %51 = vector.load %arg2[%c0_34, %c3, %c0_35, %c0_36] : memref<8x8x2x128xf32, #tpu.memory_space<vmem>>, vector<8x1x2x128xf32>
    %52 = vector.shape_cast %51 : vector<8x1x2x128xf32> to vector<8x2x128xf32>
    %53 = arith.addf %50, %52 : vector<8x2x128xf32>
    %cst_37 = arith.constant 5.000000e-01 : f32
    %54 = vector.broadcast %cst_37 : f32 to vector<8x2x128xf32>
    %55 = arith.cmpf ogt, %53, %54 : vector<8x2x128xf32>
    %56 = arith.extui %55 : vector<8x2x128xi1> to vector<8x2x128xi32>
    %57 = arith.sitofp %56 : vector<8x2x128xi32> to vector<8x2x128xf32>
    %c0_38 = arith.constant 0 : index
    %c3_39 = arith.constant 3 : index
    %c0_40 = arith.constant 0 : index
    %c0_41 = arith.constant 0 : index
    %58 = vector.load %arg3[%c0_38, %c3_39, %c0_40, %c0_41] : memref<8x8x2x128xf32, #tpu.memory_space<vmem>>, vector<8x1x2x128xf32>
    %59 = vector.shape_cast %58 : vector<8x1x2x128xf32> to vector<8x2x128xf32>
    %60 = vector.shape_cast %57 : vector<8x2x128xf32> to vector<8x1x2x128xf32>
    tpu.vector_store %arg3[%c0_38, %c3_39, %c0_40, %c0_41], %60 {strides = array<i32>} : memref<8x8x2x128xf32, #tpu.memory_space<vmem>>, vector<8x1x2x128xf32>,
    %cst_42 = arith.constant 5.000000e-01 : f32
    %61 = vector.broadcast %cst_42 : f32 to vector<8x2x128xf32>
    %62 = arith.subf %53, %61 : vector<8x2x128xf32>
    %63 = arith.select %55, %62, %53 : vector<8x2x128xi1>, vector<8x2x128xf32>
    %cst_43 = arith.constant 5.000000e-01 : f32
    %64 = vector.broadcast %cst_43 : f32 to vector<8x2x128xf32>
    %65 = arith.mulf %63, %64 : vector<8x2x128xf32>
    %c0_44 = arith.constant 0 : index
    %c4 = arith.constant 4 : index
    %c0_45 = arith.constant 0 : index
    %c0_46 = arith.constant 0 : index
    %66 = vector.load %arg2[%c0_44, %c4, %c0_45, %c0_46] : memref<8x8x2x128xf32, #tpu.memory_space<vmem>>, vector<8x1x2x128xf32>
    %67 = vector.shape_cast %66 : vector<8x1x2x128xf32> to vector<8x2x128xf32>
    %68 = arith.addf %65, %67 : vector<8x2x128xf32>
    %cst_47 = arith.constant 5.000000e-01 : f32
    %69 = vector.broadcast %cst_47 : f32 to vector<8x2x128xf32>
    %70 = arith.cmpf ogt, %68, %69 : vector<8x2x128xf32>
    %71 = arith.extui %70 : vector<8x2x128xi1> to vector<8x2x128xi32>
    %72 = arith.sitofp %71 : vector<8x2x128xi32> to vector<8x2x128xf32>
    %c0_48 = arith.constant 0 : index
    %c4_49 = arith.constant 4 : index
    %c0_50 = arith.constant 0 : index
    %c0_51 = arith.constant 0 : index
    %73 = vector.load %arg3[%c0_48, %c4_49, %c0_50, %c0_51] : memref<8x8x2x128xf32, #tpu.memory_space<vmem>>, vector<8x1x2x128xf32>
    %74 = vector.shape_cast %73 : vector<8x1x2x128xf32> to vector<8x2x128xf32>
    %75 = vector.shape_cast %72 : vector<8x2x128xf32> to vector<8x1x2x128xf32>
    tpu.vector_store %arg3[%c0_48, %c4_49, %c0_50, %c0_51], %75 {strides = array<i32>} : memref<8x8x2x128xf32, #tpu.memory_space<vmem>>, vector<8x1x2x128xf32>,
    %cst_52 = arith.constant 5.000000e-01 : f32
    %76 = vector.broadcast %cst_52 : f32 to vector<8x2x128xf32>
    %77 = arith.subf %68, %76 : vector<8x2x128xf32>
    %78 = arith.select %70, %77, %68 : vector<8x2x128xi1>, vector<8x2x128xf32>
    %cst_53 = arith.constant 5.000000e-01 : f32
    %79 = vector.broadcast %cst_53 : f32 to vector<8x2x128xf32>
    %80 = arith.mulf %78, %79 : vector<8x2x128xf32>
    %c0_54 = arith.constant 0 : index
    %c5 = arith.constant 5 : index
    %c0_55 = arith.constant 0 : index
    %c0_56 = arith.constant 0 : index
    %81 = vector.load %arg2[%c0_54, %c5, %c0_55, %c0_56] : memref<8x8x2x128xf32, #tpu.memory_space<vmem>>, vector<8x1x2x128xf32>
    %82 = vector.shape_cast %81 : vector<8x1x2x128xf32> to vector<8x2x128xf32>
    %83 = arith.addf %80, %82 : vector<8x2x128xf32>
    %cst_57 = arith.constant 5.000000e-01 : f32
    %84 = vector.broadcast %cst_57 : f32 to vector<8x2x128xf32>
    %85 = arith.cmpf ogt, %83, %84 : vector<8x2x128xf32>
    %86 = arith.extui %85 : vector<8x2x128xi1> to vector<8x2x128xi32>
    %87 = arith.sitofp %86 : vector<8x2x128xi32> to vector<8x2x128xf32>
    %c0_58 = arith.constant 0 : index
    %c5_59 = arith.constant 5 : index
    %c0_60 = arith.constant 0 : index
    %c0_61 = arith.constant 0 : index
    %88 = vector.load %arg3[%c0_58, %c5_59, %c0_60, %c0_61] : memref<8x8x2x128xf32, #tpu.memory_space<vmem>>, vector<8x1x2x128xf32>
    %89 = vector.shape_cast %88 : vector<8x1x2x128xf32> to vector<8x2x128xf32>
    %90 = vector.shape_cast %87 : vector<8x2x128xf32> to vector<8x1x2x128xf32>
    tpu.vector_store %arg3[%c0_58, %c5_59, %c0_60, %c0_61], %90 {strides = array<i32>} : memref<8x8x2x128xf32, #tpu.memory_space<vmem>>, vector<8x1x2x128xf32>,
    %cst_62 = arith.constant 5.000000e-01 : f32
    %91 = vector.broadcast %cst_62 : f32 to vector<8x2x128xf32>
    %92 = arith.subf %83, %91 : vector<8x2x128xf32>
    %93 = arith.select %85, %92, %83 : vector<8x2x128xi1>, vector<8x2x128xf32>
    %cst_63 = arith.constant 5.000000e-01 : f32
    %94 = vector.broadcast %cst_63 : f32 to vector<8x2x128xf32>
    %95 = arith.mulf %93, %94 : vector<8x2x128xf32>
    %c0_64 = arith.constant 0 : index
    %c6 = arith.constant 6 : index
    %c0_65 = arith.constant 0 : index
    %c0_66 = arith.constant 0 : index
    %96 = vector.load %arg2[%c0_64, %c6, %c0_65, %c0_66] : memref<8x8x2x128xf32, #tpu.memory_space<vmem>>, vector<8x1x2x128xf32>
    %97 = vector.shape_cast %96 : vector<8x1x2x128xf32> to vector<8x2x128xf32>
    %98 = arith.addf %95, %97 : vector<8x2x128xf32>
    %cst_67 = arith.constant 5.000000e-01 : f32
    %99 = vector.broadcast %cst_67 : f32 to vector<8x2x128xf32>
    %100 = arith.cmpf ogt, %98, %99 : vector<8x2x128xf32>
    %101 = arith.extui %100 : vector<8x2x128xi1> to vector<8x2x128xi32>
    %102 = arith.sitofp %101 : vector<8x2x128xi32> to vector<8x2x128xf32>
    %c0_68 = arith.constant 0 : index
    %c6_69 = arith.constant 6 : index
    %c0_70 = arith.constant 0 : index
    %c0_71 = arith.constant 0 : index
    %103 = vector.load %arg3[%c0_68, %c6_69, %c0_70, %c0_71] : memref<8x8x2x128xf32, #tpu.memory_space<vmem>>, vector<8x1x2x128xf32>
    %104 = vector.shape_cast %103 : vector<8x1x2x128xf32> to vector<8x2x128xf32>
    %105 = vector.shape_cast %102 : vector<8x2x128xf32> to vector<8x1x2x128xf32>
    tpu.vector_store %arg3[%c0_68, %c6_69, %c0_70, %c0_71], %105 {strides = array<i32>} : memref<8x8x2x128xf32, #tpu.memory_space<vmem>>, vector<8x1x2x128xf32>,
    %cst_72 = arith.constant 5.000000e-01 : f32
    %106 = vector.broadcast %cst_72 : f32 to vector<8x2x128xf32>
    %107 = arith.subf %98, %106 : vector<8x2x128xf32>
    %108 = arith.select %100, %107, %98 : vector<8x2x128xi1>, vector<8x2x128xf32>
    %cst_73 = arith.constant 5.000000e-01 : f32
    %109 = vector.broadcast %cst_73 : f32 to vector<8x2x128xf32>
    %110 = arith.mulf %108, %109 : vector<8x2x128xf32>
    %c0_74 = arith.constant 0 : index
    %c7 = arith.constant 7 : index
    %c0_75 = arith.constant 0 : index
    %c0_76 = arith.constant 0 : index
    %111 = vector.load %arg2[%c0_74, %c7, %c0_75, %c0_76] : memref<8x8x2x128xf32, #tpu.memory_space<vmem>>, vector<8x1x2x128xf32>
    %112 = vector.shape_cast %111 : vector<8x1x2x128xf32> to vector<8x2x128xf32>
    %113 = arith.addf %110, %112 : vector<8x2x128xf32>
    %cst_77 = arith.constant 5.000000e-01 : f32
    %114 = vector.broadcast %cst_77 : f32 to vector<8x2x128xf32>
    %115 = arith.cmpf ogt, %113, %114 : vector<8x2x128xf32>
    %116 = arith.extui %115 : vector<8x2x128xi1> to vector<8x2x128xi32>
    %117 = arith.sitofp %116 : vector<8x2x128xi32> to vector<8x2x128xf32>
    %c0_78 = arith.constant 0 : index
    %c7_79 = arith.constant 7 : index
    %c0_80 = arith.constant 0 : index
    %c0_81 = arith.constant 0 : index
    %118 = vector.load %arg3[%c0_78, %c7_79, %c0_80, %c0_81] : memref<8x8x2x128xf32, #tpu.memory_space<vmem>>, vector<8x1x2x128xf32>
    %119 = vector.shape_cast %118 : vector<8x1x2x128xf32> to vector<8x2x128xf32>
    %120 = vector.shape_cast %117 : vector<8x2x128xf32> to vector<8x1x2x128xf32>
    tpu.vector_store %arg3[%c0_78, %c7_79, %c0_80, %c0_81], %120 {strides = array<i32>} : memref<8x8x2x128xf32, #tpu.memory_space<vmem>>, vector<8x1x2x128xf32>,
    %cst_82 = arith.constant 5.000000e-01 : f32
    %121 = vector.broadcast %cst_82 : f32 to vector<8x2x128xf32>
    %122 = arith.subf %113, %121 : vector<8x2x128xf32>
    %123 = arith.select %115, %122, %113 : vector<8x2x128xi1>, vector<8x2x128xf32>
    %c0_83 = arith.constant 0 : index
    %c0_84 = arith.constant 0 : index
    %c0_85 = arith.constant 0 : index
    %124 = vector.load %arg4[%c0_83, %c0_84, %c0_85] : memref<8x2x128xf32, #tpu.memory_space<vmem>>, vector<8x2x128xf32>
    tpu.vector_store %arg4[%c0_83, %c0_84, %c0_85], %123 {strides = array<i32>} : memref<8x2x128xf32, #tpu.memory_space<vmem>>, vector<8x2x128xf32>,
    return
  }
  func.func @transform_0(%arg0: i32, %arg1: i32) -> (i32, i32, i32, i32) {
    %c0_i32 = arith.constant 0 : i32
    %c0_i32_0 = arith.constant 0 : i32
    %c0_i32_1 = arith.constant 0 : i32
    return %arg0, %arg1, %c0_i32, %c0_i32_0 : i32, i32, i32, i32
  }
  func.func @transform_1(%arg0: i32, %arg1: i32) -> (i32, i32, i32, i32) {
    %c0_i32 = arith.constant 0 : i32
    %c0_i32_0 = arith.constant 0 : i32
    %c0_i32_1 = arith.constant 0 : i32
    return %arg0, %arg1, %c0_i32, %c0_i32_0 : i32, i32, i32, i32
  }
}

</mosaic_0001>

<llo_original>
// kernel: tpu_custom_call.1
$region0: #{tpu_custom_call.1}
  #allocation0 [shape = 'u32[]', space=smem, size = 0x4, offset = 0x4, fixed_abs, tag = 'smem constant byte address 0x4 - core index']
  #allocation1 [shape = 'u32[144,128]{1,0:T(1,128)}', space=vmem, size = 0x12000, scoped, tag = 'internal scratch']
  #allocation2 [shape = 'f32[8,2,128]{2,1,0:T(2,128)}', space=vmem, size = 0x2000, scoped, tag = 'scratch operand']
  %s0 = inlined_call_operand.hbm [shape: f32[8,8,2,128], index: 0, kind: input, shape index: {}]
  %s1 = inlined_call_operand.hbm [shape: f32[8,8,2,128], index: 1, kind: output, shape index: {}]
  %s2 = sld [smem:[#allocation0]]
  $region22: #{tpu_custom_call.1} parent=0
    _
  %s4 = ssub.s32 1, %s2
  %s5 = scalar_select 0, %s4, %s2
  $region1: #{tpu_custom_call.1} parent=0
    #allocation3 [shape = 'u8[65536]{0}', space=vmem, size = 0x10000, scoped, tag = 'input window, operand 0, single buffered']
    #allocation4 [shape = 's32[1]{0}', space=sflag, size = 0x4, scoped, tag = 'scoped memory for tpu_custom_call.1']
    #allocation5 [shape = 's32[1]{0}', space=sflag, size = 0x4, scoped, tag = 'scoped memory for tpu_custom_call.1']
    #allocation6 [shape = 'u8[65536]{0}', space=vmem, size = 0x10000, scoped, tag = 'output window, operand 0, single buffered']
    %6 = vsyncpa [#allocation4], 0
    %7 = vsyncpa [#allocation5], 0
    // Predicated region
    $region2: #{tpu_custom_call.1} parent=1 // pred_check
      _
    $region3: #{tpu_custom_call.1} parent=1 // pred_check_branch
      %9 = sbr.rel (0) target = $region5
    $region4: #{tpu_custom_call.1} parent=1 // pred_region
      %s11 = ssub.s32 2048, 2048
      %12 = vsyncadd [#allocation4], %s11
      %s13 = sshll.u32 [#allocation3], 4
      %s14 = int_to_ptr.vmem [resolvable:$true] %s13
      %19 = dma.hbm_to_vmem [thread:$0]  %s0, 2048, %s14, [#allocation4], 32, 32, 2
    $region5: #{tpu_custom_call.1} parent=1 // pred_fallthru
      _
    // Predicated region
    $region6: #{tpu_custom_call.1} parent=1 // pred_check
      _
    $region7: #{tpu_custom_call.1} parent=1 // pred_check_branch
      %21 = sbr.rel (0) target = $region9
    $region8: #{tpu_custom_call.1} parent=1 // pred_region
      %22 = dma.done [#allocation4], 2048
    $region9: #{tpu_custom_call.1} parent=1 // pred_fallthru
      _
    %p23 = scmp.eq.s32.totalorder 0, 0
    // Predicated region
    $region10: #{tpu_custom_call.1} parent=1 // pred_check
      %p24 = pneg %p23
    $region11: #{tpu_custom_call.1} parent=1 // pred_check_branch
      %26 = sbr.rel (%p24) target = $region13
    $region12: #{tpu_custom_call.1} parent=1 // pred_region
      %27 = vst [vmem:[#allocation2] sm:$0x3] 0.0
      %28 = vst [vmem:[#allocation2 + $0x2] sm:$0x3] 0.0
      %29 = vst [vmem:[#allocation2 + $0x4] sm:$0x3] 0.0
      %30 = vst [vmem:[#allocation2 + $0x6] sm:$0x3] 0.0
      %31 = vst [vmem:[#allocation2 + $0x8] sm:$0x3] 0.0
      %32 = vst [vmem:[#allocation2 + $0xa] sm:$0x3] 0.0
      %33 = vst [vmem:[#allocation2 + $0xc] sm:$0x3] 0.0
      %34 = vst [vmem:[#allocation2 + $0xe] sm:$0x3] 0.0
    $region13: #{tpu_custom_call.1} parent=1 // pred_fallthru
      _
    %v35 = vld [vmem:[#allocation2] sm:$0x3]
    %v36 = vld [vmem:[#allocation2 + $0x2] sm:$0x3]
    %v37 = vld [vmem:[#allocation2 + $0x4] sm:$0x3]
    %v38 = vld [vmem:[#allocation2 + $0x6] sm:$0x3]
    %v39 = vld [vmem:[#allocation2 + $0x8] sm:$0x3]
    %v40 = vld [vmem:[#allocation2 + $0xa] sm:$0x3]
    %v41 = vld [vmem:[#allocation2 + $0xc] sm:$0x3]
    %v42 = vld [vmem:[#allocation2 + $0xe] sm:$0x3]
    %v43 = vmul.f32 %v35, 0.5
    %v44 = vmul.f32 %v36, 0.5
    %v45 = vmul.f32 %v37, 0.5
    %v46 = vmul.f32 %v38, 0.5
    %v47 = vmul.f32 %v39, 0.5
    %v48 = vmul.f32 %v40, 0.5
    %v49 = vmul.f32 %v41, 0.5
    %v50 = vmul.f32 %v42, 0.5
    %v51 = vld [vmem:[#allocation3] sm:$0x3]
    %v52 = vld [vmem:[#allocation3 + $0x10] sm:$0x3]
    %v53 = vld [vmem:[#allocation3 + $0x20] sm:$0x3]
    %v54 = vld [vmem:[#allocation3 + $0x30] sm:$0x3]
    %v55 = vld [vmem:[#allocation3 + $0x40] sm:$0x3]
    %v56 = vld [vmem:[#allocation3 + $0x50] sm:$0x3]
    %v57 = vld [vmem:[#allocation3 + $0x60] sm:$0x3]
    %v58 = vld [vmem:[#allocation3 + $0x70] sm:$0x3]
    %v59 = vadd.f32 %v43, %v51
    %v60 = vadd.f32 %v44, %v52
    %v61 = vadd.f32 %v45, %v53
    %v62 = vadd.f32 %v46, %v54
    %v63 = vadd.f32 %v47, %v55
    %v64 = vadd.f32 %v48, %v56
    %v65 = vadd.f32 %v49, %v57
    %v66 = vadd.f32 %v50, %v58
    %vm67 = vcmp.gt.f32.partialorder %v59, 0.5
    %vm68 = vcmp.gt.f32.partialorder %v60, 0.5
    %vm69 = vcmp.gt.f32.partialorder %v61, 0.5
    %vm70 = vcmp.gt.f32.partialorder %v62, 0.5
    %vm71 = vcmp.gt.f32.partialorder %v63, 0.5
    %vm72 = vcmp.gt.f32.partialorder %v64, 0.5
    %vm73 = vcmp.gt.f32.partialorder %v65, 0.5
    %vm74 = vcmp.gt.f32.partialorder %v66, 0.5
    %v75 = vsel %vm67, 1, 0
    %v76 = vsel %vm68, 1, 0
    %v77 = vsel %vm69, 1, 0
    %v78 = vsel %vm70, 1, 0
    %v79 = vsel %vm71, 1, 0
    %v80 = vsel %vm72, 1, 0
    %v81 = vsel %vm73, 1, 0
    %v82 = vsel %vm74, 1, 0
    %v83 = vcvt.s32.f32 %v75
    %v84 = vcvt.s32.f32 %v76
    %v85 = vcvt.s32.f32 %v77
    %v86 = vcvt.s32.f32 %v78
    %v87 = vcvt.s32.f32 %v79
    %v88 = vcvt.s32.f32 %v80
    %v89 = vcvt.s32.f32 %v81
    %v90 = vcvt.s32.f32 %v82
    %91 = vst [vmem:[#allocation6] sm:$0x3] %v83
    %92 = vst [vmem:[#allocation6 + $0x10] sm:$0x3] %v84
    %93 = vst [vmem:[#allocation6 + $0x20] sm:$0x3] %v85
    %94 = vst [vmem:[#allocation6 + $0x30] sm:$0x3] %v86
    %95 = vst [vmem:[#allocation6 + $0x40] sm:$0x3] %v87
    %96 = vst [vmem:[#allocation6 + $0x50] sm:$0x3] %v88
    %97 = vst [vmem:[#allocation6 + $0x60] sm:$0x3] %v89
    %98 = vst [vmem:[#allocation6 + $0x70] sm:$0x3] %v90
    %v99 = vsub.f32 %v59, 0.5
    %v100 = vsub.f32 %v60, 0.5
    %v101 = vsub.f32 %v61, 0.5
    %v102 = vsub.f32 %v62, 0.5
    %v103 = vsub.f32 %v63, 0.5
    %v104 = vsub.f32 %v64, 0.5
    %v105 = vsub.f32 %v65, 0.5
    %v106 = vsub.f32 %v66, 0.5
    %v107 = vsel %vm67, %v99, %v59
    %v108 = vsel %vm68, %v100, %v60
    %v109 = vsel %vm69, %v101, %v61
    %v110 = vsel %vm70, %v102, %v62
    %v111 = vsel %vm71, %v103, %v63
    %v112 = vsel %vm72, %v104, %v64
    %v113 = vsel %vm73, %v105, %v65
    %v114 = vsel %vm74, %v106, %v66
    %v115 = vmul.f32 %v107, 0.5
    %v116 = vmul.f32 %v108, 0.5
    %v117 = vmul.f32 %v109, 0.5
    %v118 = vmul.f32 %v110, 0.5
    %v119 = vmul.f32 %v111, 0.5
    %v120 = vmul.f32 %v112, 0.5
    %v121 = vmul.f32 %v113, 0.5
    %v122 = vmul.f32 %v114, 0.5
    %s123 = scalar_lea.vmem [#allocation3], 2
    %v124 = vld [vmem:[%s123] sm:$0x3]
    %v125 = vld [vmem:[%s123 + $0x10] sm:$0x3]
    %v126 = vld [vmem:[%s123 + $0x20] sm:$0x3]
    %v127 = vld [vmem:[%s123 + $0x30] sm:$0x3]
    %v128 = vld [vmem:[%s123 + $0x40] sm:$0x3]
    %v129 = vld [vmem:[%s123 + $0x50] sm:$0x3]
    %v130 = vld [vmem:[%s123 + $0x60] sm:$0x3]
    %v131 = vld [vmem:[%s123 + $0x70] sm:$0x3]
    %v132 = vadd.f32 %v115, %v124
    %v133 = vadd.f32 %v116, %v125
    %v134 = vadd.f32 %v117, %v126
    %v135 = vadd.f32 %v118, %v127
    %v136 = vadd.f32 %v119, %v128
    %v137 = vadd.f32 %v120, %v129
    %v138 = vadd.f32 %v121, %v130
    %v139 = vadd.f32 %v122, %v131
    %vm140 = vcmp.gt.f32.partialorder %v132, 0.5
    %vm141 = vcmp.gt.f32.partialorder %v133, 0.5
    %vm142 = vcmp.gt.f32.partialorder %v134, 0.5
    %vm143 = vcmp.gt.f32.partialorder %v135, 0.5
    %vm144 = vcmp.gt.f32.partialorder %v136, 0.5
    %vm145 = vcmp.gt.f32.partialorder %v137, 0.5
    %vm146 = vcmp.gt.f32.partialorder %v138, 0.5
    %vm147 = vcmp.gt.f32.partialorder %v139, 0.5
    %v148 = vsel %vm140, 1, 0
    %v149 = vsel %vm141, 1, 0
    %v150 = vsel %vm142, 1, 0
    %v151 = vsel %vm143, 1, 0
    %v152 = vsel %vm144, 1, 0
    %v153 = vsel %vm145, 1, 0
    %v154 = vsel %vm146, 1, 0
    %v155 = vsel %vm147, 1, 0
    %v156 = vcvt.s32.f32 %v148
    %v157 = vcvt.s32.f32 %v149
    %v158 = vcvt.s32.f32 %v150
    %v159 = vcvt.s32.f32 %v151
    %v160 = vcvt.s32.f32 %v152
    %v161 = vcvt.s32.f32 %v153
    %v162 = vcvt.s32.f32 %v154
    %v163 = vcvt.s32.f32 %v155
    %s164 = scalar_lea.vmem [#allocation6], 2
    %165 = vst [vmem:[%s164] sm:$0x3] %v156
    %166 = vst [vmem:[%s164 + $0x10] sm:$0x3] %v157
    %167 = vst [vmem:[%s164 + $0x20] sm:$0x3] %v158
    %168 = vst [vmem:[%s164 + $0x30] sm:$0x3] %v159
    %169 = vst [vmem:[%s164 + $0x40] sm:$0x3] %v160
    %170 = vst [vmem:[%s164 + $0x50] sm:$0x3] %v161
    %171 = vst [vmem:[%s164 + $0x60] sm:$0x3] %v162
    %172 = vst [vmem:[%s164 + $0x70] sm:$0x3] %v163
    %v173 = vsub.f32 %v132, 0.5
    %v174 = vsub.f32 %v133, 0.5
    %v175 = vsub.f32 %v134, 0.5
    %v176 = vsub.f32 %v135, 0.5
    %v177 = vsub.f32 %v136, 0.5
    %v178 = vsub.f32 %v137, 0.5
    %v179 = vsub.f32 %v138, 0.5
    %v180 = vsub.f32 %v139, 0.5
    %v181 = vsel %vm140, %v173, %v132
    %v182 = vsel %vm141, %v174, %v133
    %v183 = vsel %vm142, %v175, %v134
    %v184 = vsel %vm143, %v176, %v135
    %v185 = vsel %vm144, %v177, %v136
    %v186 = vsel %vm145, %v178, %v137
    %v187 = vsel %vm146, %v179, %v138
    %v188 = vsel %vm147, %v180, %v139
    %v189 = vmul.f32 %v181, 0.5
    %v190 = vmul.f32 %v182, 0.5
    %v191 = vmul.f32 %v183, 0.5
    %v192 = vmul.f32 %v184, 0.5
    %v193 = vmul.f32 %v185, 0.5
    %v194 = vmul.f32 %v186, 0.5
    %v195 = vmul.f32 %v187, 0.5
    %v196 = vmul.f32 %v188, 0.5
    %s197 = scalar_lea.vmem [#allocation3], 4
    %v198 = vld [vmem:[%s197] sm:$0x3]
    %v199 = vld [vmem:[%s197 + $0x10] sm:$0x3]
    %v200 = vld [vmem:[%s197 + $0x20] sm:$0x3]
    %v201 = vld [vmem:[%s197 + $0x30] sm:$0x3]
    %v202 = vld [vmem:[%s197 + $0x40] sm:$0x3]
    %v203 = vld [vmem:[%s197 + $0x50] sm:$0x3]
    %v204 = vld [vmem:[%s197 + $0x60] sm:$0x3]
    %v205 = vld [vmem:[%s197 + $0x70] sm:$0x3]
    %v206 = vadd.f32 %v189, %v198
    %v207 = vadd.f32 %v190, %v199
    %v208 = vadd.f32 %v191, %v200
    %v209 = vadd.f32 %v192, %v201
    %v210 = vadd.f32 %v193, %v202
    %v211 = vadd.f32 %v194, %v203
    %v212 = vadd.f32 %v195, %v204
    %v213 = vadd.f32 %v196, %v205
    %vm214 = vcmp.gt.f32.partialorder %v206, 0.5
    %vm215 = vcmp.gt.f32.partialorder %v207, 0.5
    %vm216 = vcmp.gt.f32.partialorder %v208, 0.5
    %vm217 = vcmp.gt.f32.partialorder %v209, 0.5
    %vm218 = vcmp.gt.f32.partialorder %v210, 0.5
    %vm219 = vcmp.gt.f32.partialorder %v211, 0.5
    %vm220 = vcmp.gt.f32.partialorder %v212, 0.5
    %vm221 = vcmp.gt.f32.partialorder %v213, 0.5
    %v222 = vsel %vm214, 1, 0
    %v223 = vsel %vm215, 1, 0
    %v224 = vsel %vm216, 1, 0
    %v225 = vsel %vm217, 1, 0
    %v226 = vsel %vm218, 1, 0
    %v227 = vsel %vm219, 1, 0
    %v228 = vsel %vm220, 1, 0
    %v229 = vsel %vm221, 1, 0
    %v230 = vcvt.s32.f32 %v222
    %v231 = vcvt.s32.f32 %v223
    %v232 = vcvt.s32.f32 %v224
    %v233 = vcvt.s32.f32 %v225
    %v234 = vcvt.s32.f32 %v226
    %v235 = vcvt.s32.f32 %v227
    %v236 = vcvt.s32.f32 %v228
    %v237 = vcvt.s32.f32 %v229
    %s238 = scalar_lea.vmem [#allocation6], 4
    %239 = vst [vmem:[%s238] sm:$0x3] %v230
    %240 = vst [vmem:[%s238 + $0x10] sm:$0x3] %v231
    %241 = vst [vmem:[%s238 + $0x20] sm:$0x3] %v232
    %242 = vst [vmem:[%s238 + $0x30] sm:$0x3] %v233
    %243 = vst [vmem:[%s238 + $0x40] sm:$0x3] %v234
    %244 = vst [vmem:[%s238 + $0x50] sm:$0x3] %v235
    %245 = vst [vmem:[%s238 + $0x60] sm:$0x3] %v236
    %246 = vst [vmem:[%s238 + $0x70] sm:$0x3] %v237
    %v247 = vsub.f32 %v206, 0.5
    %v248 = vsub.f32 %v207, 0.5
    %v249 = vsub.f32 %v208, 0.5
    %v250 = vsub.f32 %v209, 0.5
    %v251 = vsub.f32 %v210, 0.5
    %v252 = vsub.f32 %v211, 0.5
    %v253 = vsub.f32 %v212, 0.5
    %v254 = vsub.f32 %v213, 0.5
    %v255 = vsel %vm214, %v247, %v206
    %v256 = vsel %vm215, %v248, %v207
    %v257 = vsel %vm216, %v249, %v208
    %v258 = vsel %vm217, %v250, %v209
    %v259 = vsel %vm218, %v251, %v210
    %v260 = vsel %vm219, %v252, %v211
    %v261 = vsel %vm220, %v253, %v212
    %v262 = vsel %vm221, %v254, %v213
    %v263 = vmul.f32 %v255, 0.5
    %v264 = vmul.f32 %v256, 0.5
    %v265 = vmul.f32 %v257, 0.5
    %v266 = vmul.f32 %v258, 0.5
    %v267 = vmul.f32 %v259, 0.5
    %v268 = vmul.f32 %v260, 0.5
    %v269 = vmul.f32 %v261, 0.5
    %v270 = vmul.f32 %v262, 0.5
    %s271 = scalar_lea.vmem [#allocation3], 6
    %v272 = vld [vmem:[%s271] sm:$0x3]
    %v273 = vld [vmem:[%s271 + $0x10] sm:$0x3]
    %v274 = vld [vmem:[%s271 + $0x20] sm:$0x3]
    %v275 = vld [vmem:[%s271 + $0x30] sm:$0x3]
    %v276 = vld [vmem:[%s271 + $0x40] sm:$0x3]
    %v277 = vld [vmem:[%s271 + $0x50] sm:$0x3]
    %v278 = vld [vmem:[%s271 + $0x60] sm:$0x3]
    %v279 = vld [vmem:[%s271 + $0x70] sm:$0x3]
    %v280 = vadd.f32 %v263, %v272
    %v281 = vadd.f32 %v264, %v273
    %v282 = vadd.f32 %v265, %v274
    %v283 = vadd.f32 %v266, %v275
    %v284 = vadd.f32 %v267, %v276
    %v285 = vadd.f32 %v268, %v277
    %v286 = vadd.f32 %v269, %v278
    %v287 = vadd.f32 %v270, %v279
    %vm288 = vcmp.gt.f32.partialorder %v280, 0.5
    %vm289 = vcmp.gt.f32.partialorder %v281, 0.5
    %vm290 = vcmp.gt.f32.partialorder %v282, 0.5
    %vm291 = vcmp.gt.f32.partialorder %v283, 0.5
    %vm292 = vcmp.gt.f32.partialorder %v284, 0.5
    %vm293 = vcmp.gt.f32.partialorder %v285, 0.5
    %vm294 = vcmp.gt.f32.partialorder %v286, 0.5
    %vm295 = vcmp.gt.f32.partialorder %v287, 0.5
    %v296 = vsel %vm288, 1, 0
    %v297 = vsel %vm289, 1, 0
    %v298 = vsel %vm290, 1, 0
    %v299 = vsel %vm291, 1, 0
    %v300 = vsel %vm292, 1, 0
    %v301 = vsel %vm293, 1, 0
    %v302 = vsel %vm294, 1, 0
    %v303 = vsel %vm295, 1, 0
    %v304 = vcvt.s32.f32 %v296
    %v305 = vcvt.s32.f32 %v297
    %v306 = vcvt.s32.f32 %v298
    %v307 = vcvt.s32.f32 %v299
    %v308 = vcvt.s32.f32 %v300
    %v309 = vcvt.s32.f32 %v301
    %v310 = vcvt.s32.f32 %v302
    %v311 = vcvt.s32.f32 %v303
    %s312 = scalar_lea.vmem [#allocation6], 6
    %313 = vst [vmem:[%s312] sm:$0x3] %v304
    %314 = vst [vmem:[%s312 + $0x10] sm:$0x3] %v305
    %315 = vst [vmem:[%s312 + $0x20] sm:$0x3] %v306
    %316 = vst [vmem:[%s312 + $0x30] sm:$0x3] %v307
    %317 = vst [vmem:[%s312 + $0x40] sm:$0x3] %v308
    %318 = vst [vmem:[%s312 + $0x50] sm:$0x3] %v309
    %319 = vst [vmem:[%s312 + $0x60] sm:$0x3] %v310
    %320 = vst [vmem:[%s312 + $0x70] sm:$0x3] %v311
    %v321 = vsub.f32 %v280, 0.5
    %v322 = vsub.f32 %v281, 0.5
    %v323 = vsub.f32 %v282, 0.5
    %v324 = vsub.f32 %v283, 0.5
    %v325 = vsub.f32 %v284, 0.5
    %v326 = vsub.f32 %v285, 0.5
    %v327 = vsub.f32 %v286, 0.5
    %v328 = vsub.f32 %v287, 0.5
    %v329 = vsel %vm288, %v321, %v280
    %v330 = vsel %vm289, %v322, %v281
    %v331 = vsel %vm290, %v323, %v282
    %v332 = vsel %vm291, %v324, %v283
    %v333 = vsel %vm292, %v325, %v284
    %v334 = vsel %vm293, %v326, %v285
    %v335 = vsel %vm294, %v327, %v286
    %v336 = vsel %vm295, %v328, %v287
    %v337 = vmul.f32 %v329, 0.5
    %v338 = vmul.f32 %v330, 0.5
    %v339 = vmul.f32 %v331, 0.5
    %v340 = vmul.f32 %v332, 0.5
    %v341 = vmul.f32 %v333, 0.5
    %v342 = vmul.f32 %v334, 0.5
    %v343 = vmul.f32 %v335, 0.5
    %v344 = vmul.f32 %v336, 0.5
    %s345 = scalar_lea.vmem [#allocation3], 8
    %v346 = vld [vmem:[%s345] sm:$0x3]
    %v347 = vld [vmem:[%s345 + $0x10] sm:$0x3]
    %v348 = vld [vmem:[%s345 + $0x20] sm:$0x3]
    %v349 = vld [vmem:[%s345 + $0x30] sm:$0x3]
    %v350 = vld [vmem:[%s345 + $0x40] sm:$0x3]
    %v351 = vld [vmem:[%s345 + $0x50] sm:$0x3]
    %v352 = vld [vmem:[%s345 + $0x60] sm:$0x3]
    %v353 = vld [vmem:[%s345 + $0x70] sm:$0x3]
    %v354 = vadd.f32 %v337, %v346
    %v355 = vadd.f32 %v338, %v347
    %v356 = vadd.f32 %v339, %v348
    %v357 = vadd.f32 %v340, %v349
    %v358 = vadd.f32 %v341, %v350
    %v359 = vadd.f32 %v342, %v351
    %v360 = vadd.f32 %v343, %v352
    %v361 = vadd.f32 %v344, %v353
    %vm362 = vcmp.gt.f32.partialorder %v354, 0.5
    %vm363 = vcmp.gt.f32.partialorder %v355, 0.5
    %vm364 = vcmp.gt.f32.partialorder %v356, 0.5
    %vm365 = vcmp.gt.f32.partialorder %v357, 0.5
    %vm366 = vcmp.gt.f32.partialorder %v358, 0.5
    %vm367 = vcmp.gt.f32.partialorder %v359, 0.5
    %vm368 = vcmp.gt.f32.partialorder %v360, 0.5
    %vm369 = vcmp.gt.f32.partialorder %v361, 0.5
    %v370 = vsel %vm362, 1, 0
    %v371 = vsel %vm363, 1, 0
    %v372 = vsel %vm364, 1, 0
    %v373 = vsel %vm365, 1, 0
    %v374 = vsel %vm366, 1, 0
    %v375 = vsel %vm367, 1, 0
    %v376 = vsel %vm368, 1, 0
    %v377 = vsel %vm369, 1, 0
    %v378 = vcvt.s32.f32 %v370
    %v379 = vcvt.s32.f32 %v371
    %v380 = vcvt.s32.f32 %v372
    %v381 = vcvt.s32.f32 %v373
    %v382 = vcvt.s32.f32 %v374
    %v383 = vcvt.s32.f32 %v375
    %v384 = vcvt.s32.f32 %v376
    %v385 = vcvt.s32.f32 %v377
    %s386 = scalar_lea.vmem [#allocation6], 8
    %387 = vst [vmem:[%s386] sm:$0x3] %v378
    %388 = vst [vmem:[%s386 + $0x10] sm:$0x3] %v379
    %389 = vst [vmem:[%s386 + $0x20] sm:$0x3] %v380
    %390 = vst [vmem:[%s386 + $0x30] sm:$0x3] %v381
    %391 = vst [vmem:[%s386 + $0x40] sm:$0x3] %v382
    %392 = vst [vmem:[%s386 + $0x50] sm:$0x3] %v383
    %393 = vst [vmem:[%s386 + $0x60] sm:$0x3] %v384
    %394 = vst [vmem:[%s386 + $0x70] sm:$0x3] %v385
    %v395 = vsub.f32 %v354, 0.5
    %v396 = vsub.f32 %v355, 0.5
    %v397 = vsub.f32 %v356, 0.5
    %v398 = vsub.f32 %v357, 0.5
    %v399 = vsub.f32 %v358, 0.5
    %v400 = vsub.f32 %v359, 0.5
    %v401 = vsub.f32 %v360, 0.5
    %v402 = vsub.f32 %v361, 0.5
    %v403 = vsel %vm362, %v395, %v354
    %v404 = vsel %vm363, %v396, %v355
    %v405 = vsel %vm364, %v397, %v356
    %v406 = vsel %vm365, %v398, %v357
    %v407 = vsel %vm366, %v399, %v358
    %v408 = vsel %vm367, %v400, %v359
    %v409 = vsel %vm368, %v401, %v360
    %v410 = vsel %vm369, %v402, %v361
    %v411 = vmul.f32 %v403, 0.5
    %v412 = vmul.f32 %v404, 0.5
    %v413 = vmul.f32 %v405, 0.5
    %v414 = vmul.f32 %v406, 0.5
    %v415 = vmul.f32 %v407, 0.5
    %v416 = vmul.f32 %v408, 0.5
    %v417 = vmul.f32 %v409, 0.5
    %v418 = vmul.f32 %v410, 0.5
    %s419 = scalar_lea.vmem [#allocation3], 10
    %v420 = vld [vmem:[%s419] sm:$0x3]
    %v421 = vld [vmem:[%s419 + $0x10] sm:$0x3]
    %v422 = vld [vmem:[%s419 + $0x20] sm:$0x3]
    %v423 = vld [vmem:[%s419 + $0x30] sm:$0x3]
    %v424 = vld [vmem:[%s419 + $0x40] sm:$0x3]
    %v425 = vld [vmem:[%s419 + $0x50] sm:$0x3]
    %v426 = vld [vmem:[%s419 + $0x60] sm:$0x3]
    %v427 = vld [vmem:[%s419 + $0x70] sm:$0x3]
    %v428 = vadd.f32 %v411, %v420
    %v429 = vadd.f32 %v412, %v421
    %v430 = vadd.f32 %v413, %v422
    %v431 = vadd.f32 %v414, %v423
    %v432 = vadd.f32 %v415, %v424
    %v433 = vadd.f32 %v416, %v425
    %v434 = vadd.f32 %v417, %v426
    %v435 = vadd.f32 %v418, %v427
    %vm436 = vcmp.gt.f32.partialorder %v428, 0.5
    %vm437 = vcmp.gt.f32.partialorder %v429, 0.5
    %vm438 = vcmp.gt.f32.partialorder %v430, 0.5
    %vm439 = vcmp.gt.f32.partialorder %v431, 0.5
    %vm440 = vcmp.gt.f32.partialorder %v432, 0.5
    %vm441 = vcmp.gt.f32.partialorder %v433, 0.5
    %vm442 = vcmp.gt.f32.partialorder %v434, 0.5
    %vm443 = vcmp.gt.f32.partialorder %v435, 0.5
    %v444 = vsel %vm436, 1, 0
    %v445 = vsel %vm437, 1, 0
    %v446 = vsel %vm438, 1, 0
    %v447 = vsel %vm439, 1, 0
    %v448 = vsel %vm440, 1, 0
    %v449 = vsel %vm441, 1, 0
    %v450 = vsel %vm442, 1, 0
    %v451 = vsel %vm443, 1, 0
    %v452 = vcvt.s32.f32 %v444
    %v453 = vcvt.s32.f32 %v445
    %v454 = vcvt.s32.f32 %v446
    %v455 = vcvt.s32.f32 %v447
    %v456 = vcvt.s32.f32 %v448
    %v457 = vcvt.s32.f32 %v449
    %v458 = vcvt.s32.f32 %v450
    %v459 = vcvt.s32.f32 %v451
    %s460 = scalar_lea.vmem [#allocation6], 10
    %461 = vst [vmem:[%s460] sm:$0x3] %v452
    %462 = vst [vmem:[%s460 + $0x10] sm:$0x3] %v453
    %463 = vst [vmem:[%s460 + $0x20] sm:$0x3] %v454
    %464 = vst [vmem:[%s460 + $0x30] sm:$0x3] %v455
    %465 = vst [vmem:[%s460 + $0x40] sm:$0x3] %v456
    %466 = vst [vmem:[%s460 + $0x50] sm:$0x3] %v457
    %467 = vst [vmem:[%s460 + $0x60] sm:$0x3] %v458
    %468 = vst [vmem:[%s460 + $0x70] sm:$0x3] %v459
    %v469 = vsub.f32 %v428, 0.5
    %v470 = vsub.f32 %v429, 0.5
    %v471 = vsub.f32 %v430, 0.5
    %v472 = vsub.f32 %v431, 0.5
    %v473 = vsub.f32 %v432, 0.5
    %v474 = vsub.f32 %v433, 0.5
    %v475 = vsub.f32 %v434, 0.5
    %v476 = vsub.f32 %v435, 0.5
    %v477 = vsel %vm436, %v469, %v428
    %v478 = vsel %vm437, %v470, %v429
    %v479 = vsel %vm438, %v471, %v430
    %v480 = vsel %vm439, %v472, %v431
    %v481 = vsel %vm440, %v473, %v432
    %v482 = vsel %vm441, %v474, %v433
    %v483 = vsel %vm442, %v475, %v434
    %v484 = vsel %vm443, %v476, %v435
    %v485 = vmul.f32 %v477, 0.5
    %v486 = vmul.f32 %v478, 0.5
    %v487 = vmul.f32 %v479, 0.5
    %v488 = vmul.f32 %v480, 0.5
    %v489 = vmul.f32 %v481, 0.5
    %v490 = vmul.f32 %v482, 0.5
    %v491 = vmul.f32 %v483, 0.5
    %v492 = vmul.f32 %v484, 0.5
    %s493 = scalar_lea.vmem [#allocation3], 12
    %v494 = vld [vmem:[%s493] sm:$0x3]
    %v495 = vld [vmem:[%s493 + $0x10] sm:$0x3]
    %v496 = vld [vmem:[%s493 + $0x20] sm:$0x3]
    %v497 = vld [vmem:[%s493 + $0x30] sm:$0x3]
    %v498 = vld [vmem:[%s493 + $0x40] sm:$0x3]
    %v499 = vld [vmem:[%s493 + $0x50] sm:$0x3]
    %v500 = vld [vmem:[%s493 + $0x60] sm:$0x3]
    %v501 = vld [vmem:[%s493 + $0x70] sm:$0x3]
    %v502 = vadd.f32 %v485, %v494
    %v503 = vadd.f32 %v486, %v495
    %v504 = vadd.f32 %v487, %v496
    %v505 = vadd.f32 %v488, %v497
    %v506 = vadd.f32 %v489, %v498
    %v507 = vadd.f32 %v490, %v499
    %v508 = vadd.f32 %v491, %v500
    %v509 = vadd.f32 %v492, %v501
    %vm510 = vcmp.gt.f32.partialorder %v502, 0.5
    %vm511 = vcmp.gt.f32.partialorder %v503, 0.5
    %vm512 = vcmp.gt.f32.partialorder %v504, 0.5
    %vm513 = vcmp.gt.f32.partialorder %v505, 0.5
    %vm514 = vcmp.gt.f32.partialorder %v506, 0.5
    %vm515 = vcmp.gt.f32.partialorder %v507, 0.5
    %vm516 = vcmp.gt.f32.partialorder %v508, 0.5
    %vm517 = vcmp.gt.f32.partialorder %v509, 0.5
    %v518 = vsel %vm510, 1, 0
    %v519 = vsel %vm511, 1, 0
    %v520 = vsel %vm512, 1, 0
    %v521 = vsel %vm513, 1, 0
    %v522 = vsel %vm514, 1, 0
    %v523 = vsel %vm515, 1, 0
    %v524 = vsel %vm516, 1, 0
    %v525 = vsel %vm517, 1, 0
    %v526 = vcvt.s32.f32 %v518
    %v527 = vcvt.s32.f32 %v519
    %v528 = vcvt.s32.f32 %v520
    %v529 = vcvt.s32.f32 %v521
    %v530 = vcvt.s32.f32 %v522
    %v531 = vcvt.s32.f32 %v523
    %v532 = vcvt.s32.f32 %v524
    %v533 = vcvt.s32.f32 %v525
    %s534 = scalar_lea.vmem [#allocation6], 12
    %535 = vst [vmem:[%s534] sm:$0x3] %v526
    %536 = vst [vmem:[%s534 + $0x10] sm:$0x3] %v527
    %537 = vst [vmem:[%s534 + $0x20] sm:$0x3] %v528
    %538 = vst [vmem:[%s534 + $0x30] sm:$0x3] %v529
    %539 = vst [vmem:[%s534 + $0x40] sm:$0x3] %v530
    %540 = vst [vmem:[%s534 + $0x50] sm:$0x3] %v531
    %541 = vst [vmem:[%s534 + $0x60] sm:$0x3] %v532
    %542 = vst [vmem:[%s534 + $0x70] sm:$0x3] %v533
    %v543 = vsub.f32 %v502, 0.5
    %v544 = vsub.f32 %v503, 0.5
    %v545 = vsub.f32 %v504, 0.5
    %v546 = vsub.f32 %v505, 0.5
    %v547 = vsub.f32 %v506, 0.5
    %v548 = vsub.f32 %v507, 0.5
    %v549 = vsub.f32 %v508, 0.5
    %v550 = vsub.f32 %v509, 0.5
    %v551 = vsel %vm510, %v543, %v502
    %v552 = vsel %vm511, %v544, %v503
    %v553 = vsel %vm512, %v545, %v504
    %v554 = vsel %vm513, %v546, %v505
    %v555 = vsel %vm514, %v547, %v506
    %v556 = vsel %vm515, %v548, %v507
    %v557 = vsel %vm516, %v549, %v508
    %v558 = vsel %vm517, %v550, %v509
    %v559 = vmul.f32 %v551, 0.5
    %v560 = vmul.f32 %v552, 0.5
    %v561 = vmul.f32 %v553, 0.5
    %v562 = vmul.f32 %v554, 0.5
    %v563 = vmul.f32 %v555, 0.5
    %v564 = vmul.f32 %v556, 0.5
    %v565 = vmul.f32 %v557, 0.5
    %v566 = vmul.f32 %v558, 0.5
    %s567 = scalar_lea.vmem [#allocation3], 14
    %v568 = vld [vmem:[%s567] sm:$0x3]
    %v569 = vld [vmem:[%s567 + $0x10] sm:$0x3]
    %v570 = vld [vmem:[%s567 + $0x20] sm:$0x3]
    %v571 = vld [vmem:[%s567 + $0x30] sm:$0x3]
    %v572 = vld [vmem:[%s567 + $0x40] sm:$0x3]
    %v573 = vld [vmem:[%s567 + $0x50] sm:$0x3]
    %v574 = vld [vmem:[%s567 + $0x60] sm:$0x3]
    %v575 = vld [vmem:[%s567 + $0x70] sm:$0x3]
    %v576 = vadd.f32 %v559, %v568
    %v577 = vadd.f32 %v560, %v569
    %v578 = vadd.f32 %v561, %v570
    %v579 = vadd.f32 %v562, %v571
    %v580 = vadd.f32 %v563, %v572
    %v581 = vadd.f32 %v564, %v573
    %v582 = vadd.f32 %v565, %v574
    %v583 = vadd.f32 %v566, %v575
    %vm584 = vcmp.gt.f32.partialorder %v576, 0.5
    %vm585 = vcmp.gt.f32.partialorder %v577, 0.5
    %vm586 = vcmp.gt.f32.partialorder %v578, 0.5
    %vm587 = vcmp.gt.f32.partialorder %v579, 0.5
    %vm588 = vcmp.gt.f32.partialorder %v580, 0.5
    %vm589 = vcmp.gt.f32.partialorder %v581, 0.5
    %vm590 = vcmp.gt.f32.partialorder %v582, 0.5
    %vm591 = vcmp.gt.f32.partialorder %v583, 0.5
    %v592 = vsel %vm584, 1, 0
    %v593 = vsel %vm585, 1, 0
    %v594 = vsel %vm586, 1, 0
    %v595 = vsel %vm587, 1, 0
    %v596 = vsel %vm588, 1, 0
    %v597 = vsel %vm589, 1, 0
    %v598 = vsel %vm590, 1, 0
    %v599 = vsel %vm591, 1, 0
    %v600 = vcvt.s32.f32 %v592
    %v601 = vcvt.s32.f32 %v593
    %v602 = vcvt.s32.f32 %v594
    %v603 = vcvt.s32.f32 %v595
    %v604 = vcvt.s32.f32 %v596
    %v605 = vcvt.s32.f32 %v597
    %v606 = vcvt.s32.f32 %v598
    %v607 = vcvt.s32.f32 %v599
    %s608 = scalar_lea.vmem [#allocation6], 14
    %609 = vst [vmem:[%s608] sm:$0x3] %v600
    %610 = vst [vmem:[%s608 + $0x10] sm:$0x3] %v601
    %611 = vst [vmem:[%s608 + $0x20] sm:$0x3] %v602
    %612 = vst [vmem:[%s608 + $0x30] sm:$0x3] %v603
    %613 = vst [vmem:[%s608 + $0x40] sm:$0x3] %v604
    %614 = vst [vmem:[%s608 + $0x50] sm:$0x3] %v605
    %615 = vst [vmem:[%s608 + $0x60] sm:$0x3] %v606
    %616 = vst [vmem:[%s608 + $0x70] sm:$0x3] %v607
    %v617 = vsub.f32 %v576, 0.5
    %v618 = vsub.f32 %v577, 0.5
    %v619 = vsub.f32 %v578, 0.5
    %v620 = vsub.f32 %v579, 0.5
    %v621 = vsub.f32 %v580, 0.5
    %v622 = vsub.f32 %v581, 0.5
    %v623 = vsub.f32 %v582, 0.5
    %v624 = vsub.f32 %v583, 0.5
    %v625 = vsel %vm584, %v617, %v576
    %v626 = vsel %vm585, %v618, %v577
    %v627 = vsel %vm586, %v619, %v578
    %v628 = vsel %vm587, %v620, %v579
    %v629 = vsel %vm588, %v621, %v580
    %v630 = vsel %vm589, %v622, %v581
    %v631 = vsel %vm590, %v623, %v582
    %v632 = vsel %vm591, %v624, %v583
    %633 = vst [vmem:[#allocation2] sm:$0x3] %v625
    %634 = vst [vmem:[#allocation2 + $0x2] sm:$0x3] %v626
    %635 = vst [vmem:[#allocation2 + $0x4] sm:$0x3] %v627
    %636 = vst [vmem:[#allocation2 + $0x6] sm:$0x3] %v628
    %637 = vst [vmem:[#allocation2 + $0x8] sm:$0x3] %v629
    %638 = vst [vmem:[#allocation2 + $0xa] sm:$0x3] %v630
    %639 = vst [vmem:[#allocation2 + $0xc] sm:$0x3] %v631
    %640 = vst [vmem:[#allocation2 + $0xe] sm:$0x3] %v632
    // Predicated region
    $region14: #{tpu_custom_call.1} parent=1 // pred_check
      _
    $region15: #{tpu_custom_call.1} parent=1 // pred_check_branch
      %642 = sbr.rel (0) target = $region17
    $region16: #{tpu_custom_call.1} parent=1 // pred_region
      %s644 = ssub.s32 2048, 2048
      %645 = vsyncadd [#allocation5], %s644
      %s646 = sshll.u32 [#allocation6], 4
      %s647 = int_to_ptr.vmem [resolvable:$true] %s646
      %652 = dma.vmem_to_hbm [thread:$0]  %s647, 2048, %s1, [#allocation5], 32, 32, 2
    $region17: #{tpu_custom_call.1} parent=1 // pred_fallthru
      _
    // Predicated region
    $region18: #{tpu_custom_call.1} parent=1 // pred_check
      _
    $region19: #{tpu_custom_call.1} parent=1 // pred_check_branch
      %654 = sbr.rel (0) target = $region21
    $region20: #{tpu_custom_call.1} parent=1 // pred_region
      %655 = dma.done [#allocation5], 2048
    $region21: #{tpu_custom_call.1} parent=1 // pred_fallthru
      _
    %656 = vsyncpa [#allocation4], 1
    %657 = vsyncpa [#allocation5], 1

</llo_original>
